<compile_context>
chip_gen: v6e
topology: v6e:2x2x1
jax: 0.10.0
libtpu: 0.0.40
codegen_flags: <defaults>
</compile_context>

<pallas_src>
from math import sqrt

import jax
import jax.numpy as jnp
from jax.experimental import pallas as pl
from jax.experimental.pallas import tpu as pltpu


def _round_up(n: int, m: int) -> int:
    return ((n + m - 1) // m) * m


# ---------------------------------------------------------------------------
# Fused Pallas kernel:
#   t -> (gather / lerp from embedding table) -> silu(x@W1+b1) -> silu(h@W2+b2)
# ---------------------------------------------------------------------------
def _diffusion_embedding_kernel(t_ref, emb_ref, w1_ref, b1_ref, w2_ref, b2_ref, o_ref):
    t = t_ref[...]                                            # (TB, 1) f32
    TB = t_ref.shape[0]
    T = emb_ref.shape[0]

    # Linear-interpolation "hat" weights over table rows:
    #   weight(c) = max(0, 1 - |t - c|)
    # -> (1 - frac) at floor(t), frac at ceil(t), exactly 1.0 at integer t.
    # This reproduces BOTH the integer-gather and float-lerp paths of the
    # PyTorch module, and turns the data-dependent gather into a tiny matmul.
    col = jax.lax.broadcasted_iota(jnp.int32, (TB, T), 1).astype(jnp.float32)
    sel = jnp.maximum(1.0 - jnp.abs(t - col), 0.0)            # (TB, T)
    x = jnp.dot(sel, emb_ref[...], preferred_element_type=jnp.float32)  # (TB, 128) f32

    # projection1 + SiLU  (bf16 MXU operands, f32 accumulation, f32 VPU/EUP math)
    h = jnp.dot(x.astype(jnp.bfloat16), w1_ref[...],
                preferred_element_type=jnp.float32) + b1_ref[...]       # (TB, 512)
    h = h * jax.nn.sigmoid(h)

    # projection2 + SiLU
    y = jnp.dot(h.astype(jnp.bfloat16), w2_ref[...],
                preferred_element_type=jnp.float32) + b2_ref[...]       # (TB, 512)
    o_ref[...] = y * jax.nn.sigmoid(y)


def diffusion_embedding_forward(timestep, emb, w1_bf16, b1, w2_bf16, b2, *, max_tb=128):
    """timestep: (B,) int or float -> (B, 512) f32, fully fused in one pallas_call."""
    B = timestep.shape[0]
    T, E = emb.shape                      # (max_steps, 128)
    H = w1_bf16.shape[1]                  # 512

    t = timestep.astype(jnp.float32).reshape(B, 1)

    # Keep batch tiles a multiple of 8 (f32 sublane group) so stores are unmasked.
    TB = min(max_tb, _round_up(B, 8))
    Bp = _round_up(B, TB)
    if Bp != B:
        t = jnp.pad(t, ((0, Bp - B), (0, 0)))
    grid = (Bp // TB,)

    cost = pl.CostEstimate(
        flops=2 * Bp * (T * E + E * H + H * H),
        transcendentals=Bp * 2 * H,                 # two sigmoids per row
        bytes_accessed=(t.size * 4 + emb.size * 4
                        + w1_bf16.size * 2 + w2_bf16.size * 2
                        + b1.size * 4 + b2.size * 4 + Bp * H * 4),
    )

    out = pl.pallas_call(
        _diffusion_embedding_kernel,
        out_shape=jax.ShapeDtypeStruct((Bp, H), jnp.float32),
        grid_spec=pltpu.PrefetchScalarGridSpec(
            num_scalar_prefetch=0,
            grid=grid,
            in_specs=[
                pl.BlockSpec((TB, 1), lambda i: (i, 0)),   # timesteps (per batch tile)
                pl.BlockSpec((T, E), lambda i: (0, 0)),    # embedding table (resident)
                pl.BlockSpec((E, H), lambda i: (0, 0)),    # W1 bf16 (resident)
                pl.BlockSpec((1, H), lambda i: (0, 0)),    # b1
                pl.BlockSpec((H, H), lambda i: (0, 0)),    # W2 bf16 (resident)
                pl.BlockSpec((1, H), lambda i: (0, 0)),    # b2
            ],
            out_specs=pl.BlockSpec((TB, H), lambda i: (i, 0)),
        ),
        compiler_params=pltpu.CompilerParams(
            dimension_semantics=("parallel",),     # shard batch tiles across TCs (v7x)
        ),
        cost_estimate=cost,
    )(t, emb, w1_bf16, b1, w2_bf16, b2)
    return out[:B]


# ---------------------------------------------------------------------------
# Module-equivalent wrapper
# ---------------------------------------------------------------------------
def build_embedding(max_steps: int) -> jnp.ndarray:
    """Replicates DiffusionEmbedding._build_embedding -> (max_steps, 128) f32."""
    steps = jnp.arange(max_steps, dtype=jnp.float32)[:, None]          # (T, 1)
    dims = jnp.arange(64, dtype=jnp.float32)[None, :]                  # (1, 64)
    table = steps * 10.0 ** (dims * 4.0 / 63.0)                        # (T, 64)
    return jnp.concatenate([jnp.sin(table), jnp.cos(table)], axis=1)   # (T, 128)


class DiffusionEmbeddingPallas:
    def __init__(self, max_steps: int, key):
        self.embedding = build_embedding(max_steps)                    # (T, 128) f32
        k1, k2, k3, k4 = jax.random.split(key, 4)
        # nn.Linear default init: U(-1/sqrt(fan_in), 1/sqrt(fan_in)); deterministic here.
        lim1 = 1.0 / sqrt(128.0)
        lim2 = 1.0 / sqrt(512.0)
        # f32 masters (reference / checkpoint layout), stored (in, out).
        self.w1 = jax.random.uniform(k1, (128, 512), jnp.float32, -lim1, lim1)
        self.b1 = jax.random.uniform(k2, (1, 512), jnp.float32, -lim1, lim1)
        self.w2 = jax.random.uniform(k3, (512, 512), jnp.float32, -lim2, lim2)
        self.b2 = jax.random.uniform(k4, (1, 512), jnp.float32, -lim2, lim2)
        # bf16 copies fed to the kernel (halves weight DMA; MXU-native width).
        self.w1_bf16 = self.w1.astype(jnp.bfloat16)
        self.w2_bf16 = self.w2.astype(jnp.bfloat16)

    def __call__(self, timestep):
        # TODO(synk): PyTorch raises on out-of-range integer timesteps; the fused
        # selection-matmul instead yields zero interpolation weights for them.
        return diffusion_embedding_forward(
            timestep, self.embedding, self.w1_bf16, self.b1, self.w2_bf16, self.b2)


# ---------------------------------------------------------------------------
# Pure-JAX reference (precision-matched: bf16 matmul operands, f32 accumulation)
# ---------------------------------------------------------------------------
def reference_forward(model: DiffusionEmbeddingPallas, timestep):
    if jnp.issubdtype(timestep.dtype, jnp.integer):
        x = model.embedding[timestep]
    else:
        low_idx = jnp.floor(timestep).astype(jnp.int32)
        high_idx = jnp.ceil(timestep).astype(jnp.int32)
        low = model.embedding[low_idx]
        high = model.embedding[high_idx]
        x = low + (high - low) * (timestep - low_idx.astype(timestep.dtype))[:, None]
    w1 = model.w1_bf16.astype(jnp.float32)
    w2 = model.w2_bf16.astype(jnp.float32)
    h = x.astype(jnp.bfloat16).astype(jnp.float32) @ w1 + model.b1
    h = h * jax.nn.sigmoid(h)
    y = h.astype(jnp.bfloat16).astype(jnp.float32) @ w2 + model.b2
    return y * jax.nn.sigmoid(y)


if __name__ == "__main__":
    key = jax.random.PRNGKey(0)
    max_steps = 50
    model = DiffusionEmbeddingPallas(max_steps, key)

    # integer timesteps (the common path in the PyTorch module)
    t_int = jnp.array([0, 1, 5, 7, 12, 23, 31, 49], dtype=jnp.int32)   # (B=8,)
    out = jax.block_until_ready(model(t_int))
    ref = reference_forward(model, t_int)
    assert out.shape == (8, 512)
    # bf16 weights/matmul operands -> loosened tolerance vs f32-exact reference
    assert jnp.allclose(out, ref, atol=1e-2, rtol=1e-2), "mismatch vs reference (int path)"

    # float timesteps (lerp path), non-multiple-of-8 batch to exercise padding
    t_f = jnp.array([0.5, 3.25, 10.9, 48.0, 7.5], dtype=jnp.float32)   # (B=5,)
    out_f = jax.block_until_ready(model(t_f))
    ref_f = reference_forward(model, t_f)
    assert out_f.shape == (5, 512)
    assert jnp.allclose(out_f, ref_f, atol=1e-2, rtol=1e-2), "mismatch vs reference (lerp path)"

    print("KERNEL_OK")
</pallas_src>

<mosaic_0001>
module attributes {stable_mosaic.version = 11 : i64} {
  func.func @_diffusion_embedding_kernel(%arg0: i32, %arg1: memref<8x1xf32, #tpu.memory_space<vmem>>, %arg2: memref<50x128xf32, #tpu.memory_space<vmem>>, %arg3: memref<128x512xbf16, #tpu.memory_space<vmem>>, %arg4: memref<1x512xf32, #tpu.memory_space<vmem>>, %arg5: memref<512x512xbf16, #tpu.memory_space<vmem>>, %arg6: memref<1x512xf32, #tpu.memory_space<vmem>>, %arg7: memref<8x512xf32, #tpu.memory_space<vmem>>) attributes {dimension_semantics = [#tpu.dimension_semantics<parallel>], iteration_bounds = array<i64: 1>, scalar_prefetch = 0 : i64, scratch_operands = 0 : i64, tpu.core_type = #tpu.core_type<tc>, window_params = [{transform_indices = @transform_0, window_bounds = array<i64: 8, 1>}, {pipeline_mode = #tpu.pipeline_mode<synchronous>, transform_indices = @transform_1, window_bounds = array<i64: 50, 128>}, {pipeline_mode = #tpu.pipeline_mode<synchronous>, transform_indices = @transform_2, window_bounds = array<i64: 128, 512>}, {pipeline_mode = #tpu.pipeline_mode<synchronous>, transform_indices = @transform_3, window_bounds = array<i64: 1, 512>}, {pipeline_mode = #tpu.pipeline_mode<synchronous>, transform_indices = @transform_4, window_bounds = array<i64: 512, 512>}, {pipeline_mode = #tpu.pipeline_mode<synchronous>, transform_indices = @transform_5, window_bounds = array<i64: 1, 512>}, {transform_indices = @transform_6, window_bounds = array<i64: 8, 512>}]} {
    %c0 = arith.constant 0 : index
    %c0_0 = arith.constant 0 : index
    %0 = vector.load %arg1[%c0, %c0_0] : memref<8x1xf32, #tpu.memory_space<vmem>>, vector<8x1xf32>
    %1 = tpu.iota {dimensions = array<i32: 1>} : vector<8x50xi32>
    %2 = arith.sitofp %1 : vector<8x50xi32> to vector<8x50xf32>
    %3 = vector.broadcast %0 : vector<8x1xf32> to vector<8x50xf32>
    %4 = arith.subf %3, %2 : vector<8x50xf32>
    %5 = math.absf %4 : vector<8x50xf32>
    %cst = arith.constant 1.000000e+00 : f32
    %6 = vector.broadcast %cst : f32 to vector<8x50xf32>
    %7 = arith.subf %6, %5 : vector<8x50xf32>
    %cst_1 = arith.constant 0.000000e+00 : f32
    %8 = vector.broadcast %cst_1 : f32 to vector<8x50xf32>
    %9 = arith.maximumf %7, %8 : vector<8x50xf32>
    %c0_2 = arith.constant 0 : index
    %c0_3 = arith.constant 0 : index
    %10 = vector.load %arg2[%c0_2, %c0_3] : memref<50x128xf32, #tpu.memory_space<vmem>>, vector<50x128xf32>
    %cst_4 = arith.constant dense<0.000000e+00> : vector<8x128xf32>
    %11 = tpu.matmul %9, %10, %cst_4 {dimension_numbers = #tpu.dot_dimension_numbers<[1], [0], [0], [1], [0, 0, 1, 1], [], []>} : vector<8x50xf32>, vector<50x128xf32>, vector<8x128xf32> -> vector<8x128xf32>
    %12 = arith.truncf %11 : vector<8x128xf32> to vector<8x128xbf16>
    %c0_5 = arith.constant 0 : index
    %c0_6 = arith.constant 0 : index
    %13 = vector.load %arg3[%c0_5, %c0_6] : memref<128x512xbf16, #tpu.memory_space<vmem>>, vector<128x512xbf16>
    %cst_7 = arith.constant dense<0.000000e+00> : vector<8x512xf32>
    %14 = tpu.matmul %12, %13, %cst_7 {dimension_numbers = #tpu.dot_dimension_numbers<[1], [0], [0], [1], [0, 0, 1, 1], [], []>} : vector<8x128xbf16>, vector<128x512xbf16>, vector<8x512xf32> -> vector<8x512xf32>
    %c0_8 = arith.constant 0 : index
    %c0_9 = arith.constant 0 : index
    %15 = vector.load %arg4[%c0_8, %c0_9] : memref<1x512xf32, #tpu.memory_space<vmem>>, vector<1x512xf32>
    %16 = vector.broadcast %15 : vector<1x512xf32> to vector<8x512xf32>
    %17 = arith.addf %14, %16 : vector<8x512xf32>
    %18 = arith.negf %17 : vector<8x512xf32>
    %19 = math.exp %18 : vector<8x512xf32>
    %cst_10 = arith.constant 1.000000e+00 : f32
    %20 = vector.broadcast %cst_10 : f32 to vector<8x512xf32>
    %21 = arith.addf %20, %19 : vector<8x512xf32>
    %22 = arith.divf %20, %21 : vector<8x512xf32>
    %23 = arith.mulf %17, %22 : vector<8x512xf32>
    %24 = arith.truncf %23 : vector<8x512xf32> to vector<8x512xbf16>
    %c0_11 = arith.constant 0 : index
    %c0_12 = arith.constant 0 : index
    %25 = vector.load %arg5[%c0_11, %c0_12] : memref<512x512xbf16, #tpu.memory_space<vmem>>, vector<512x512xbf16>
    %cst_13 = arith.constant dense<0.000000e+00> : vector<8x512xf32>
    %26 = tpu.matmul %24, %25, %cst_13 {dimension_numbers = #tpu.dot_dimension_numbers<[1], [0], [0], [1], [0, 0, 1, 1], [], []>} : vector<8x512xbf16>, vector<512x512xbf16>, vector<8x512xf32> -> vector<8x512xf32>
    %c0_14 = arith.constant 0 : index
    %c0_15 = arith.constant 0 : index
    %27 = vector.load %arg6[%c0_14, %c0_15] : memref<1x512xf32, #tpu.memory_space<vmem>>, vector<1x512xf32>
    %28 = vector.broadcast %27 : vector<1x512xf32> to vector<8x512xf32>
    %29 = arith.addf %26, %28 : vector<8x512xf32>
    %30 = arith.negf %29 : vector<8x512xf32>
    %31 = math.exp %30 : vector<8x512xf32>
    %cst_16 = arith.constant 1.000000e+00 : f32
    %32 = vector.broadcast %cst_16 : f32 to vector<8x512xf32>
    %33 = arith.addf %32, %31 : vector<8x512xf32>
    %34 = arith.divf %32, %33 : vector<8x512xf32>
    %35 = arith.mulf %29, %34 : vector<8x512xf32>
    %c0_17 = arith.constant 0 : index
    %c0_18 = arith.constant 0 : index
    %36 = vector.load %arg7[%c0_17, %c0_18] : memref<8x512xf32, #tpu.memory_space<vmem>>, vector<8x512xf32>
    tpu.vector_store %arg7[%c0_17, %c0_18], %35 {strides = array<i32>} : memref<8x512xf32, #tpu.memory_space<vmem>>, vector<8x512xf32>,
    return
  }
  func.func @transform_0(%arg0: i32) -> (i32, i32) {
    %c0_i32 = arith.constant 0 : i32
    %c0_i32_0 = arith.constant 0 : i32
    return %arg0, %c0_i32 : i32, i32
  }
  func.func @transform_1(%arg0: i32) -> (i32, i32) {
    %c0_i32 = arith.constant 0 : i32
    %c0_i32_0 = arith.constant 0 : i32
    %c0_i32_1 = arith.constant 0 : i32
    return %c0_i32, %c0_i32_0 : i32, i32
  }
  func.func @transform_2(%arg0: i32) -> (i32, i32) {
    %c0_i32 = arith.constant 0 : i32
    %c0_i32_0 = arith.constant 0 : i32
    %c0_i32_1 = arith.constant 0 : i32
    return %c0_i32, %c0_i32_0 : i32, i32
  }
  func.func @transform_3(%arg0: i32) -> (i32, i32) {
    %c0_i32 = arith.constant 0 : i32
    %c0_i32_0 = arith.constant 0 : i32
    %c0_i32_1 = arith.constant 0 : i32
    return %c0_i32, %c0_i32_0 : i32, i32
  }
  func.func @transform_4(%arg0: i32) -> (i32, i32) {
    %c0_i32 = arith.constant 0 : i32
    %c0_i32_0 = arith.constant 0 : i32
    %c0_i32_1 = arith.constant 0 : i32
    return %c0_i32, %c0_i32_0 : i32, i32
  }
  func.func @transform_5(%arg0: i32) -> (i32, i32) {
    %c0_i32 = arith.constant 0 : i32
    %c0_i32_0 = arith.constant 0 : i32
    %c0_i32_1 = arith.constant 0 : i32
    return %c0_i32, %c0_i32_0 : i32, i32
  }
  func.func @transform_6(%arg0: i32) -> (i32, i32) {
    %c0_i32 = arith.constant 0 : i32
    %c0_i32_0 = arith.constant 0 : i32
    return %arg0, %c0_i32 : i32, i32
  }
}

</mosaic_0001>

<llo_original>
// kernel: tpu_custom_call.1
$region0: #{tpu_custom_call.1}
  #allocation0 [shape = 'u32[]', space=smem, size = 0x4, offset = 0x4, fixed_abs, tag = 'smem constant byte address 0x4 - core index']
  #allocation1 [shape = 'u32[144,128]{1,0:T(1,128)}', space=vmem, size = 0x12000, scoped, tag = 'internal scratch']
  %s0 = inlined_call_operand.vmem [shape: f32[8,1], index: 0, kind: input, shape index: {}]
  %s1 = inlined_call_operand.hbm [shape: f32[50,128], index: 1, kind: input, shape index: {}]
  %s2 = inlined_call_operand.hbm [shape: bf16[128,512], index: 2, kind: input, shape index: {}]
  %s3 = inlined_call_operand.vmem [shape: f32[1,512], index: 3, kind: input, shape index: {}]
  %s4 = inlined_call_operand.hbm [shape: bf16[512,512], index: 4, kind: input, shape index: {}]
  %s5 = inlined_call_operand.vmem [shape: f32[1,512], index: 5, kind: input, shape index: {}]
  %s6 = inlined_call_operand.hbm [shape: f32[8,512], index: 6, kind: output, shape index: {}]
  %s7 = sld [smem:[#allocation0]]
  $region46: #{tpu_custom_call.1} parent=0
    _
  %s9 = ssub.s32 1, %s7
  %s10 = scalar_select 0, %s9, %s7
  $region1: #{tpu_custom_call.1} parent=0
    #allocation2 [shape = 'u8[28672]{0}', space=vmem, size = 0x7000, scoped, tag = 'input window, operand 1, single buffered']
    #allocation3 [shape = 's32[1]{0}', space=sflag, size = 0x4, scoped, tag = 'scoped memory for tpu_custom_call.1']
    #allocation4 [shape = 's32[1]{0}', space=sflag, size = 0x4, scoped, tag = 'scoped memory for tpu_custom_call.1']
    #allocation5 [shape = 'u8[131072]{0}', space=vmem, size = 0x20000, scoped, tag = 'input window, operand 2, single buffered']
    #allocation6 [shape = 's32[1]{0}', space=sflag, size = 0x4, scoped, tag = 'scoped memory for tpu_custom_call.1']
    #allocation7 [shape = 'u8[524288]{0}', space=vmem, size = 0x80000, scoped, tag = 'input window, operand 4, single buffered']
    #allocation8 [shape = 'u8[16384]{0}', space=vmem, size = 0x4000, scoped, tag = 'output window, operand 0, single buffered']
    %11 = vsyncpa [#allocation3], 0
    %12 = vsyncpa [#allocation6], 0
    %13 = vsyncpa [#allocation4], 0
    // Predicated region
    $region2: #{tpu_custom_call.1} parent=1 // pred_check
      _
    $region3: #{tpu_custom_call.1} parent=1 // pred_check_branch
      %15 = sbr.rel (0) target = $region5
    $region4: #{tpu_custom_call.1} parent=1 // pred_region
      _
    $region5: #{tpu_custom_call.1} parent=1 // pred_fallthru
      _
    // Predicated region
    $region6: #{tpu_custom_call.1} parent=1 // pred_check
      _
    $region7: #{tpu_custom_call.1} parent=1 // pred_check_branch
      %17 = sbr.rel (0) target = $region9
    $region8: #{tpu_custom_call.1} parent=1 // pred_region
      %s19 = ssub.s32 896, 896
      %20 = vsyncadd [#allocation3], %s19
      %s21 = sshll.u32 [#allocation2], 4
      %s22 = int_to_ptr.vmem [resolvable:$true] %s21
      %27 = dma.hbm_to_vmem [thread:$0]  %s1, 896, %s22, [#allocation3], 128, 128, 8
    $region9: #{tpu_custom_call.1} parent=1 // pred_fallthru
      _
    // Predicated region
    $region10: #{tpu_custom_call.1} parent=1 // pred_check
      _
    $region11: #{tpu_custom_call.1} parent=1 // pred_check_branch
      %29 = sbr.rel (0) target = $region13
    $region12: #{tpu_custom_call.1} parent=1 // pred_region
      %s31 = ssub.s32 4096, 4096
      %32 = vsyncadd [#allocation6], %s31
      %s33 = sshll.u32 [#allocation5], 4
      %s34 = int_to_ptr.vmem [resolvable:$true] %s33
      %39 = dma.hbm_to_vmem [thread:$0]  %s2, 4096, %s34, [#allocation6], 256, 256, 16
    $region13: #{tpu_custom_call.1} parent=1 // pred_fallthru
      _
    // Predicated region
    $region14: #{tpu_custom_call.1} parent=1 // pred_check
      _
    $region15: #{tpu_custom_call.1} parent=1 // pred_check_branch
      %41 = sbr.rel (0) target = $region17
    $region16: #{tpu_custom_call.1} parent=1 // pred_region
      _
    $region17: #{tpu_custom_call.1} parent=1 // pred_fallthru
      _
    // Predicated region
    $region18: #{tpu_custom_call.1} parent=1 // pred_check
      _
    $region19: #{tpu_custom_call.1} parent=1 // pred_check_branch
      %43 = sbr.rel (0) target = $region21
    $region20: #{tpu_custom_call.1} parent=1 // pred_region
      %s45 = ssub.s32 16384, 16384
      %46 = vsyncadd [#allocation6], %s45
      %s47 = sshll.u32 [#allocation7], 4
      %s48 = int_to_ptr.vmem [resolvable:$true] %s47
      %53 = dma.hbm_to_vmem [thread:$0]  %s4, 16384, %s48, [#allocation6], 256, 256, 16
    $region21: #{tpu_custom_call.1} parent=1 // pred_fallthru
      _
    // Predicated region
    $region22: #{tpu_custom_call.1} parent=1 // pred_check
      _
    $region23: #{tpu_custom_call.1} parent=1 // pred_check_branch
      %55 = sbr.rel (0) target = $region25
    $region24: #{tpu_custom_call.1} parent=1 // pred_region
      _
    $region25: #{tpu_custom_call.1} parent=1 // pred_fallthru
      _
    // Predicated region
    $region26: #{tpu_custom_call.1} parent=1 // pred_check
      _
    $region27: #{tpu_custom_call.1} parent=1 // pred_check_branch
      %57 = sbr.rel (0) target = $region29
    $region28: #{tpu_custom_call.1} parent=1 // pred_region
      %58 = dma.done [#allocation3], 896
    $region29: #{tpu_custom_call.1} parent=1 // pred_fallthru
      _
    // Predicated region
    $region30: #{tpu_custom_call.1} parent=1 // pred_check
      _
    $region31: #{tpu_custom_call.1} parent=1 // pred_check_branch
      %60 = sbr.rel (0) target = $region33
    $region32: #{tpu_custom_call.1} parent=1 // pred_region
      %61 = dma.done [#allocation6], 4096
    $region33: #{tpu_custom_call.1} parent=1 // pred_fallthru
      _
    // Predicated region
    $region34: #{tpu_custom_call.1} parent=1 // pred_check
      _
    $region35: #{tpu_custom_call.1} parent=1 // pred_check_branch
      %63 = sbr.rel (0) target = $region37
    $region36: #{tpu_custom_call.1} parent=1 // pred_region
      %64 = dma.done [#allocation6], 16384
    $region37: #{tpu_custom_call.1} parent=1 // pred_fallthru
      _
    %v66 = vld [vmem:[%s0] sm:$0xff]
    %v67 = vlaneseq
    %v68 = vand.u32 %v67, 127
    %v69 = vcvt.s32.f32 %v68
    %71 = vset.pattern.permute.xlu0 0
    %72 = vperm.xlu0 %71, %v66
    %v73 = vpop.permute.xlu0 %72
    %v75 = vsub.f32 %v73, %v69
    %v76 = vand.u32 2147483647, %v75
    %v77 = vsub.f32 1.0, %v76
    %v78 = vmax.f32 %v77, 0.0
    %v79 = vld [vmem:[#allocation2] sm:$0xff]
    %v80 = vld [vmem:[#allocation2 + $0x8] sm:$0xff]
    %v81 = vld [vmem:[#allocation2 + $0x10] sm:$0xff]
    %v82 = vld [vmem:[#allocation2 + $0x18] sm:$0xff]
    %v83 = vld [vmem:[#allocation2 + $0x20] sm:$0xff]
    %v84 = vld [vmem:[#allocation2 + $0x28] sm:$0xff]
    %v85 = vld [vmem:[#allocation2 + $0x30] sm:$0x3]
    %vm86 = vcmask 408576
    %v88 = vsel %vm86, %v78, 0
    %vm90 = vcmask 1041408
    %v92 = vsel %vm90, %v85, 0
    %94 = vmatprep.subr.mxu0 0.0
    %95 = vmatpush1.msra.mxu0 0.0
    %96 = vmatprep.subr.mxu0 0.0
    %97 = vmatpush1.msra.mxu0 0.0
    %98 = vmatprep.subr.mxu0 0.0
    %99 = vmatpush1.msra.mxu0 0.0
    %100 = vmatprep.subr.mxu0 0.0
    %101 = vmatpush1.msra.mxu0 0.0
    %102 = vmatprep.subr.mxu0 0.0
    %103 = vmatpush1.msra.mxu0 0.0
    %104 = vmatprep.subr.mxu0 0.0
    %105 = vmatpush1.msra.mxu0 0.0
    %106 = vmatprep.subr.mxu0 0.0
    %107 = vmatpush1.msra.mxu0 0.0
    %108 = vmatprep.subr.mxu0 0.0
    %109 = vmatpush1.msra.mxu0 0.0
    %110 = vmatprep.subr.mxu0 0.0
    %111 = vmatpush1.msra.mxu0 0.0
    %112 = vmatprep.subr.mxu0 0.0
    %113 = vmatpush1.msra.mxu0 %v92
    %114 = vmatprep.subr.mxu0 0.0
    %115 = vmatpush1.msra.mxu0 %v84
    %116 = vmatprep.subr.mxu0 0.0
    %117 = vmatpush1.msra.mxu0 %v83
    %118 = vmatprep.subr.mxu0 0.0
    %119 = vmatpush1.msra.mxu0 %v82
    %120 = vmatprep.subr.mxu0 0.0
    %121 = vmatpush1.msra.mxu0 %v81
    %122 = vmatprep.subr.mxu0 0.0
    %123 = vmatpush1.msra.mxu0 %v80
    %124 = vmatprep.subr.mxu0 0.0
    %125 = vmatpush1.msra.mxu0 %v79
    %126 = vmatprep.subr.mxu0 0.0
    %127 = vmatpush2.msra.mxu0 0.0
    %128 = vmatprep.subr.mxu0 0.0
    %129 = vmatpush2.msra.mxu0 0.0
    %130 = vmatprep.subr.mxu0 0.0
    %131 = vmatpush2.msra.mxu0 0.0
    %132 = vmatprep.subr.mxu0 0.0
    %133 = vmatpush2.msra.mxu0 0.0
    %134 = vmatprep.subr.mxu0 0.0
    %135 = vmatpush2.msra.mxu0 0.0
    %136 = vmatprep.subr.mxu0 0.0
    %137 = vmatpush2.msra.mxu0 0.0
    %138 = vmatprep.subr.mxu0 0.0
    %139 = vmatpush2.msra.mxu0 0.0
    %140 = vmatprep.subr.mxu0 0.0
    %141 = vmatpush2.msra.mxu0 0.0
    %142 = vmatprep.subr.mxu0 0.0
    %143 = vmatpush2.msra.mxu0 0.0
    %144 = vmatprep.subr.mxu0 0.0
    %145 = vmatpush2.msra.mxu0 0.0
    %146 = vmatprep.subr.mxu0 0.0
    %147 = vmatpush2.msra.mxu0 0.0
    %148 = vmatprep.subr.mxu0 0.0
    %149 = vmatpush2.msra.mxu0 0.0
    %150 = vmatprep.subr.mxu0 0.0
    %151 = vmatpush2.msra.mxu0 0.0
    %152 = vmatprep.subr.mxu0 0.0
    %153 = vmatpush2.msra.mxu0 0.0
    %154 = vmatprep.subr.mxu0 0.0
    %155 = vmatpush2.msra.mxu0 0.0
    %156 = vmatprep.subr.mxu0 0.0
    %157 = vmatpush2.msra.mxu0 0.0
    %158 = vmatprep.mubr.f32.mxu0 0.0
    %159 = vmatmul.mubr.f32.gmra.mxu0 %v88
    %v160 = vpop.f32.mrf.mxu0
    %v161 = vadd.f32 0.0, %v160
    %v162 = vpop.f32.mrf.mxu0
    %163 = vdwg.mxu0
    %v164 = vpack.c.bf16 %v161, %v161
    %v165 = vld [vmem:[#allocation5] sm:$0xff]
    %v166 = vld [vmem:[#allocation5 + $0x8] sm:$0xff]
    %v167 = vld [vmem:[#allocation5 + $0x10] sm:$0xff]
    %v168 = vld [vmem:[#allocation5 + $0x18] sm:$0xff]
    %v169 = vld [vmem:[#allocation5 + $0x20] sm:$0xff]
    %v170 = vld [vmem:[#allocation5 + $0x28] sm:$0xff]
    %v171 = vld [vmem:[#allocation5 + $0x30] sm:$0xff]
    %v172 = vld [vmem:[#allocation5 + $0x38] sm:$0xff]
    %v173 = vld [vmem:[#allocation5 + $0x40] sm:$0xff]
    %v174 = vld [vmem:[#allocation5 + $0x48] sm:$0xff]
    %v175 = vld [vmem:[#allocation5 + $0x50] sm:$0xff]
    %v176 = vld [vmem:[#allocation5 + $0x58] sm:$0xff]
    %v177 = vld [vmem:[#allocation5 + $0x60] sm:$0xff]
    %v178 = vld [vmem:[#allocation5 + $0x68] sm:$0xff]
    %v179 = vld [vmem:[#allocation5 + $0x70] sm:$0xff]
    %v180 = vld [vmem:[#allocation5 + $0x78] sm:$0xff]
    %v181 = vld [vmem:[#allocation5 + $0x80] sm:$0xff]
    %v182 = vld [vmem:[#allocation5 + $0x88] sm:$0xff]
    %v183 = vld [vmem:[#allocation5 + $0x90] sm:$0xff]
    %v184 = vld [vmem:[#allocation5 + $0x98] sm:$0xff]
    %v185 = vld [vmem:[#allocation5 + $0xa0] sm:$0xff]
    %v186 = vld [vmem:[#allocation5 + $0xa8] sm:$0xff]
    %v187 = vld [vmem:[#allocation5 + $0xb0] sm:$0xff]
    %v188 = vld [vmem:[#allocation5 + $0xb8] sm:$0xff]
    %v189 = vld [vmem:[#allocation5 + $0xc0] sm:$0xff]
    %v190 = vld [vmem:[#allocation5 + $0xc8] sm:$0xff]
    %v191 = vld [vmem:[#allocation5 + $0xd0] sm:$0xff]
    %v192 = vld [vmem:[#allocation5 + $0xd8] sm:$0xff]
    %v193 = vld [vmem:[#allocation5 + $0xe0] sm:$0xff]
    %v194 = vld [vmem:[#allocation5 + $0xe8] sm:$0xff]
    %v195 = vld [vmem:[#allocation5 + $0xf0] sm:$0xff]
    %v196 = vld [vmem:[#allocation5 + $0xf8] sm:$0xff]
    %v197 = vld [vmem:[%s3] sm:$0xf]
    %v199 = vlaneseq
    %v200 = vshrl.u32 %v199, 7
    %v201 = vsub.s32 0, %v200
    %v202 = vrot.slane %v197, %v201
    %v203 = vlaneseq
    %v204 = vshrl.u32 %v203, 7
    %v205 = vsub.s32 1, %v204
    %v206 = vrot.slane %v197, %v205
    %v207 = vlaneseq
    %v208 = vshrl.u32 %v207, 7
    %v209 = vsub.s32 2, %v208
    %v210 = vrot.slane %v197, %v209
    %v211 = vlaneseq
    %v212 = vshrl.u32 %v211, 7
    %v213 = vsub.s32 3, %v212
    %v214 = vrot.slane %v197, %v213
    %v251 = vunpack.c.l.b16 %v165
    %v252 = vunpack.c.h.b16 %v165
    %v253 = vunpack.c.l.b16 %v166
    %v254 = vunpack.c.h.b16 %v166
    %v255 = vunpack.c.l.b16 %v167
    %v256 = vunpack.c.h.b16 %v167
    %v257 = vunpack.c.l.b16 %v168
    %v258 = vunpack.c.h.b16 %v168
    %v259 = vunpack.c.l.b16 %v169
    %v260 = vunpack.c.h.b16 %v169
    %v261 = vunpack.c.l.b16 %v170
    %v262 = vunpack.c.h.b16 %v170
    %v263 = vunpack.c.l.b16 %v171
    %v264 = vunpack.c.h.b16 %v171
    %v265 = vunpack.c.l.b16 %v172
    %v266 = vunpack.c.h.b16 %v172
    %v267 = vunpack.c.l.b16 %v173
    %v268 = vunpack.c.h.b16 %v173
    %v269 = vunpack.c.l.b16 %v174
    %v270 = vunpack.c.h.b16 %v174
    %v271 = vunpack.c.l.b16 %v175
    %v272 = vunpack.c.h.b16 %v175
    %v273 = vunpack.c.l.b16 %v176
    %v274 = vunpack.c.h.b16 %v176
    %v275 = vunpack.c.l.b16 %v177
    %v276 = vunpack.c.h.b16 %v177
    %v277 = vunpack.c.l.b16 %v178
    %v278 = vunpack.c.h.b16 %v178
    %v279 = vunpack.c.l.b16 %v179
    %v280 = vunpack.c.h.b16 %v179
    %v281 = vunpack.c.l.b16 %v180
    %v282 = vunpack.c.h.b16 %v180
    %v283 = vunpack.c.l.b16 %v181
    %v284 = vunpack.c.h.b16 %v181
    %v285 = vunpack.c.l.b16 %v182
    %v286 = vunpack.c.h.b16 %v182
    %v287 = vunpack.c.l.b16 %v183
    %v288 = vunpack.c.h.b16 %v183
    %v289 = vunpack.c.l.b16 %v184
    %v290 = vunpack.c.h.b16 %v184
    %v291 = vunpack.c.l.b16 %v185
    %v292 = vunpack.c.h.b16 %v185
    %v293 = vunpack.c.l.b16 %v186
    %v294 = vunpack.c.h.b16 %v186
    %v295 = vunpack.c.l.b16 %v187
    %v296 = vunpack.c.h.b16 %v187
    %v297 = vunpack.c.l.b16 %v188
    %v298 = vunpack.c.h.b16 %v188
    %v299 = vunpack.c.l.b16 %v189
    %v300 = vunpack.c.h.b16 %v189
    %v301 = vunpack.c.l.b16 %v190
    %v302 = vunpack.c.h.b16 %v190
    %v303 = vunpack.c.l.b16 %v191
    %v304 = vunpack.c.h.b16 %v191
    %v305 = vunpack.c.l.b16 %v192
    %v306 = vunpack.c.h.b16 %v192
    %v307 = vunpack.c.l.b16 %v193
    %v308 = vunpack.c.h.b16 %v193
    %v309 = vunpack.c.l.b16 %v194
    %v310 = vunpack.c.h.b16 %v194
    %v311 = vunpack.c.l.b16 %v195
    %v312 = vunpack.c.h.b16 %v195
    %v313 = vunpack.c.l.b16 %v196
    %v314 = vunpack.c.h.b16 %v196
    %v315 = vpack.c.b16 %v255, %v251
    %v316 = vpack.c.b16 %v256, %v252
    %v317 = vpack.c.b16 %v257, %v253
    %v318 = vpack.c.b16 %v258, %v254
    %v319 = vpack.c.b16 %v263, %v259
    %v320 = vpack.c.b16 %v264, %v260
    %v321 = vpack.c.b16 %v265, %v261
    %v322 = vpack.c.b16 %v266, %v262
    %v323 = vpack.c.b16 %v271, %v267
    %v324 = vpack.c.b16 %v272, %v268
    %v325 = vpack.c.b16 %v273, %v269
    %v326 = vpack.c.b16 %v274, %v270
    %v327 = vpack.c.b16 %v279, %v275
    %v328 = vpack.c.b16 %v280, %v276
    %v329 = vpack.c.b16 %v281, %v277
    %v330 = vpack.c.b16 %v282, %v278
    %v331 = vpack.c.b16 %v287, %v283
    %v332 = vpack.c.b16 %v288, %v284
    %v333 = vpack.c.b16 %v289, %v285
    %v334 = vpack.c.b16 %v290, %v286
    %v335 = vpack.c.b16 %v295, %v291
    %v336 = vpack.c.b16 %v296, %v292
    %v337 = vpack.c.b16 %v297, %v293
    %v338 = vpack.c.b16 %v298, %v294
    %v339 = vpack.c.b16 %v303, %v299
    %v340 = vpack.c.b16 %v304, %v300
    %v341 = vpack.c.b16 %v305, %v301
    %v342 = vpack.c.b16 %v306, %v302
    %v343 = vpack.c.b16 %v311, %v307
    %v344 = vpack.c.b16 %v312, %v308
    %v345 = vpack.c.b16 %v313, %v309
    %v346 = vpack.c.b16 %v314, %v310
    %379 = vmatprep.subr.bf16.mxu0 %v344
    %380 = vmatpush1.bf16.msra.mxu0 %v343
    %381 = vmatprep.subr.bf16.mxu0 %v340
    %382 = vmatpush1.bf16.msra.mxu0 %v339
    %383 = vmatprep.subr.bf16.mxu0 %v336
    %384 = vmatpush1.bf16.msra.mxu0 %v335
    %385 = vmatprep.subr.bf16.mxu0 %v332
    %386 = vmatpush1.bf16.msra.mxu0 %v331
    %387 = vmatprep.subr.bf16.mxu0 %v328
    %388 = vmatpush1.bf16.msra.mxu0 %v327
    %389 = vmatprep.subr.bf16.mxu0 %v324
    %390 = vmatpush1.bf16.msra.mxu0 %v323
    %391 = vmatprep.subr.bf16.mxu0 %v320
    %392 = vmatpush1.bf16.msra.mxu0 %v319
    %393 = vmatprep.subr.bf16.mxu0 %v316
    %394 = vmatpush1.bf16.msra.mxu0 %v315
    %395 = vmatprep.subr.bf16.mxu0 0
    %396 = vmatpush2.bf16.msra.mxu0 0
    %397 = vmatprep.subr.bf16.mxu0 0
    %398 = vmatpush2.bf16.msra.mxu0 0
    %399 = vmatprep.subr.bf16.mxu0 0
    %400 = vmatpush2.bf16.msra.mxu0 0
    %401 = vmatprep.subr.bf16.mxu0 0
    %402 = vmatpush2.bf16.msra.mxu0 0
    %403 = vmatprep.subr.bf16.mxu0 0
    %404 = vmatpush2.bf16.msra.mxu0 0
    %405 = vmatprep.subr.bf16.mxu0 0
    %406 = vmatpush2.bf16.msra.mxu0 0
    %407 = vmatprep.subr.bf16.mxu0 0
    %408 = vmatpush2.bf16.msra.mxu0 0
    %409 = vmatprep.subr.bf16.mxu0 0
    %410 = vmatpush2.bf16.msra.mxu0 0
    %411 = vmatprep.mubr.bf16.mxu0 0
    %412 = vmatmul.mubr.bf16.gmra.mxu0 %v164
    %v413 = vpop.f32.mrf.mxu0
    %v414 = vadd.f32 %v202, %v413
    %v415 = vpop.f32.mrf.mxu0
    %v416 = vadd.f32 %v206, %v415
    %v417 = vpop.f32.mrf.mxu0
    %v418 = vpop.f32.mrf.mxu0
    %419 = vdwg.mxu0
    %420 = vmatprep.subr.bf16.mxu0 %v346
    %421 = vmatpush1.bf16.msra.mxu0 %v345
    %422 = vmatprep.subr.bf16.mxu0 %v342
    %423 = vmatpush1.bf16.msra.mxu0 %v341
    %424 = vmatprep.subr.bf16.mxu0 %v338
    %425 = vmatpush1.bf16.msra.mxu0 %v337
    %426 = vmatprep.subr.bf16.mxu0 %v334
    %427 = vmatpush1.bf16.msra.mxu0 %v333
    %428 = vmatprep.subr.bf16.mxu0 %v330
    %429 = vmatpush1.bf16.msra.mxu0 %v329
    %430 = vmatprep.subr.bf16.mxu0 %v326
    %431 = vmatpush1.bf16.msra.mxu0 %v325
    %432 = vmatprep.subr.bf16.mxu0 %v322
    %433 = vmatpush1.bf16.msra.mxu0 %v321
    %434 = vmatprep.subr.bf16.mxu0 %v318
    %435 = vmatpush1.bf16.msra.mxu0 %v317
    %436 = vmatprep.subr.bf16.mxu0 0
    %437 = vmatpush2.bf16.msra.mxu0 0
    %438 = vmatprep.subr.bf16.mxu0 0
    %439 = vmatpush2.bf16.msra.mxu0 0
    %440 = vmatprep.subr.bf16.mxu0 0
    %441 = vmatpush2.bf16.msra.mxu0 0
    %442 = vmatprep.subr.bf16.mxu0 0
    %443 = vmatpush2.bf16.msra.mxu0 0
    %444 = vmatprep.subr.bf16.mxu0 0
    %445 = vmatpush2.bf16.msra.mxu0 0
    %446 = vmatprep.subr.bf16.mxu0 0
    %447 = vmatpush2.bf16.msra.mxu0 0
    %448 = vmatprep.subr.bf16.mxu0 0
    %449 = vmatpush2.bf16.msra.mxu0 0
    %450 = vmatprep.subr.bf16.mxu0 0
    %451 = vmatpush2.bf16.msra.mxu0 0
    %452 = vmatprep.mubr.bf16.mxu0 0
    %453 = vmatmul.mubr.bf16.gmra.mxu0 %v164
    %v454 = vpop.f32.mrf.mxu0
    %v455 = vadd.f32 %v210, %v454
    %v456 = vpop.f32.mrf.mxu0
    %v457 = vadd.f32 %v214, %v456
    %v458 = vpop.f32.mrf.mxu0
    %v459 = vpop.f32.mrf.mxu0
    %460 = vdwg.mxu0
    %v461 = vxor.u32 %v414, 2147483648
    %v462 = vxor.u32 %v416, 2147483648
    %v463 = vxor.u32 %v455, 2147483648
    %v464 = vxor.u32 %v457, 2147483648
    %v465 = vmul.f32 %v461, 1.442695
    %v466 = vpow.pop %v465
    %v467 = vmul.f32 %v462, 1.442695
    %v468 = vpow.pop %v467
    %v469 = vmul.f32 %v463, 1.442695
    %v470 = vpow.pop %v469
    %v471 = vmul.f32 %v464, 1.442695
    %v472 = vpow.pop %v471
    %v473 = vadd.f32 %v466, 1.0
    %v474 = vadd.f32 %v468, 1.0
    %v475 = vadd.f32 %v470, 1.0
    %v476 = vadd.f32 %v472, 1.0
    %v477 = vrcp.pop %v473
    %v478 = vmul.f32 1.0, %v477
    %v479 = vrcp.pop %v474
    %v480 = vmul.f32 1.0, %v479
    %v481 = vrcp.pop %v475
    %v482 = vmul.f32 1.0, %v481
    %v483 = vrcp.pop %v476
    %v484 = vmul.f32 1.0, %v483
    %v485 = vmul.f32 %v414, %v478
    %v486 = vmul.f32 %v416, %v480
    %v487 = vmul.f32 %v455, %v482
    %v488 = vmul.f32 %v457, %v484
    %v489 = vpack.c.bf16 %v485, %v485
    %v490 = vpack.c.bf16 %v486, %v486
    %v491 = vpack.c.bf16 %v487, %v487
    %v492 = vpack.c.bf16 %v488, %v488
    %v493 = vld [vmem:[#allocation7] sm:$0xff]
    %v494 = vld [vmem:[#allocation7 + $0x8] sm:$0xff]
    %v495 = vld [vmem:[#allocation7 + $0x10] sm:$0xff]
    %v496 = vld [vmem:[#allocation7 + $0x18] sm:$0xff]
    %v497 = vld [vmem:[#allocation7 + $0x20] sm:$0xff]
    %v498 = vld [vmem:[#allocation7 + $0x28] sm:$0xff]
    %v499 = vld [vmem:[#allocation7 + $0x30] sm:$0xff]
    %v500 = vld [vmem:[#allocation7 + $0x38] sm:$0xff]
    %v501 = vld [vmem:[#allocation7 + $0x40] sm:$0xff]
    %v502 = vld [vmem:[#allocation7 + $0x48] sm:$0xff]
    %v503 = vld [vmem:[#allocation7 + $0x50] sm:$0xff]
    %v504 = vld [vmem:[#allocation7 + $0x58] sm:$0xff]
    %v505 = vld [vmem:[#allocation7 + $0x60] sm:$0xff]
    %v506 = vld [vmem:[#allocation7 + $0x68] sm:$0xff]
    %v507 = vld [vmem:[#allocation7 + $0x70] sm:$0xff]
    %v508 = vld [vmem:[#allocation7 + $0x78] sm:$0xff]
    %v509 = vld [vmem:[#allocation7 + $0x80] sm:$0xff]
    %v510 = vld [vmem:[#allocation7 + $0x88] sm:$0xff]
    %v511 = vld [vmem:[#allocation7 + $0x90] sm:$0xff]
    %v512 = vld [vmem:[#allocation7 + $0x98] sm:$0xff]
    %v513 = vld [vmem:[#allocation7 + $0xa0] sm:$0xff]
    %v514 = vld [vmem:[#allocation7 + $0xa8] sm:$0xff]
    %v515 = vld [vmem:[#allocation7 + $0xb0] sm:$0xff]
    %v516 = vld [vmem:[#allocation7 + $0xb8] sm:$0xff]
    %v517 = vld [vmem:[#allocation7 + $0xc0] sm:$0xff]
    %v518 = vld [vmem:[#allocation7 + $0xc8] sm:$0xff]
    %v519 = vld [vmem:[#allocation7 + $0xd0] sm:$0xff]
    %v520 = vld [vmem:[#allocation7 + $0xd8] sm:$0xff]
    %v521 = vld [vmem:[#allocation7 + $0xe0] sm:$0xff]
    %v522 = vld [vmem:[#allocation7 + $0xe8] sm:$0xff]
    %v523 = vld [vmem:[#allocation7 + $0xf0] sm:$0xff]
    %v524 = vld [vmem:[#allocation7 + $0xf8] sm:$0xff]
    %v525 = vld [vmem:[#allocation7 + $0x100] sm:$0xff]
    %v526 = vld [vmem:[#allocation7 + $0x108] sm:$0xff]
    %v527 = vld [vmem:[#allocation7 + $0x110] sm:$0xff]
    %v528 = vld [vmem:[#allocation7 + $0x118] sm:$0xff]
    %v529 = vld [vmem:[#allocation7 + $0x120] sm:$0xff]
    %v530 = vld [vmem:[#allocation7 + $0x128] sm:$0xff]
    %v531 = vld [vmem:[#allocation7 + $0x130] sm:$0xff]
    %v532 = vld [vmem:[#allocation7 + $0x138] sm:$0xff]
    %v533 = vld [vmem:[#allocation7 + $0x140] sm:$0xff]
    %v534 = vld [vmem:[#allocation7 + $0x148] sm:$0xff]
    %v535 = vld [vmem:[#allocation7 + $0x150] sm:$0xff]
    %v536 = vld [vmem:[#allocation7 + $0x158] sm:$0xff]
    %v537 = vld [vmem:[#allocation7 + $0x160] sm:$0xff]
    %v538 = vld [vmem:[#allocation7 + $0x168] sm:$0xff]
    %v539 = vld [vmem:[#allocation7 + $0x170] sm:$0xff]
    %v540 = vld [vmem:[#allocation7 + $0x178] sm:$0xff]
    %v541 = vld [vmem:[#allocation7 + $0x180] sm:$0xff]
    %v542 = vld [vmem:[#allocation7 + $0x188] sm:$0xff]
    %v543 = vld [vmem:[#allocation7 + $0x190] sm:$0xff]
    %v544 = vld [vmem:[#allocation7 + $0x198] sm:$0xff]
    %v545 = vld [vmem:[#allocation7 + $0x1a0] sm:$0xff]
    %v546 = vld [vmem:[#allocation7 + $0x1a8] sm:$0xff]
    %v547 = vld [vmem:[#allocation7 + $0x1b0] sm:$0xff]
    %v548 = vld [vmem:[#allocation7 + $0x1b8] sm:$0xff]
    %v549 = vld [vmem:[#allocation7 + $0x1c0] sm:$0xff]
    %v550 = vld [vmem:[#allocation7 + $0x1c8] sm:$0xff]
    %v551 = vld [vmem:[#allocation7 + $0x1d0] sm:$0xff]
    %v552 = vld [vmem:[#allocation7 + $0x1d8] sm:$0xff]
    %v553 = vld [vmem:[#allocation7 + $0x1e0] sm:$0xff]
    %v554 = vld [vmem:[#allocation7 + $0x1e8] sm:$0xff]
    %v555 = vld [vmem:[#allocation7 + $0x1f0] sm:$0xff]
    %v556 = vld [vmem:[#allocation7 + $0x1f8] sm:$0xff]
    %v557 = vld [vmem:[#allocation7 + $0x200] sm:$0xff]
    %v558 = vld [vmem:[#allocation7 + $0x208] sm:$0xff]
    %v559 = vld [vmem:[#allocation7 + $0x210] sm:$0xff]
    %v560 = vld [vmem:[#allocation7 + $0x218] sm:$0xff]
    %v561 = vld [vmem:[#allocation7 + $0x220] sm:$0xff]
    %v562 = vld [vmem:[#allocation7 + $0x228] sm:$0xff]
    %v563 = vld [vmem:[#allocation7 + $0x230] sm:$0xff]
    %v564 = vld [vmem:[#allocation7 + $0x238] sm:$0xff]
    %v565 = vld [vmem:[#allocation7 + $0x240] sm:$0xff]
    %v566 = vld [vmem:[#allocation7 + $0x248] sm:$0xff]
    %v567 = vld [vmem:[#allocation7 + $0x250] sm:$0xff]
    %v568 = vld [vmem:[#allocation7 + $0x258] sm:$0xff]
    %v569 = vld [vmem:[#allocation7 + $0x260] sm:$0xff]
    %v570 = vld [vmem:[#allocation7 + $0x268] sm:$0xff]
    %v571 = vld [vmem:[#allocation7 + $0x270] sm:$0xff]
    %v572 = vld [vmem:[#allocation7 + $0x278] sm:$0xff]
    %v573 = vld [vmem:[#allocation7 + $0x280] sm:$0xff]
    %v574 = vld [vmem:[#allocation7 + $0x288] sm:$0xff]
    %v575 = vld [vmem:[#allocation7 + $0x290] sm:$0xff]
    %v576 = vld [vmem:[#allocation7 + $0x298] sm:$0xff]
    %v577 = vld [vmem:[#allocation7 + $0x2a0] sm:$0xff]
    %v578 = vld [vmem:[#allocation7 + $0x2a8] sm:$0xff]
    %v579 = vld [vmem:[#allocation7 + $0x2b0] sm:$0xff]
    %v580 = vld [vmem:[#allocation7 + $0x2b8] sm:$0xff]
    %v581 = vld [vmem:[#allocation7 + $0x2c0] sm:$0xff]
    %v582 = vld [vmem:[#allocation7 + $0x2c8] sm:$0xff]
    %v583 = vld [vmem:[#allocation7 + $0x2d0] sm:$0xff]
    %v584 = vld [vmem:[#allocation7 + $0x2d8] sm:$0xff]
    %v585 = vld [vmem:[#allocation7 + $0x2e0] sm:$0xff]
    %v586 = vld [vmem:[#allocation7 + $0x2e8] sm:$0xff]
    %v587 = vld [vmem:[#allocation7 + $0x2f0] sm:$0xff]
    %v588 = vld [vmem:[#allocation7 + $0x2f8] sm:$0xff]
    %v589 = vld [vmem:[#allocation7 + $0x300] sm:$0xff]
    %v590 = vld [vmem:[#allocation7 + $0x308] sm:$0xff]
    %v591 = vld [vmem:[#allocation7 + $0x310] sm:$0xff]
    %v592 = vld [vmem:[#allocation7 + $0x318] sm:$0xff]
    %v593 = vld [vmem:[#allocation7 + $0x320] sm:$0xff]
    %v594 = vld [vmem:[#allocation7 + $0x328] sm:$0xff]
    %v595 = vld [vmem:[#allocation7 + $0x330] sm:$0xff]
    %v596 = vld [vmem:[#allocation7 + $0x338] sm:$0xff]
    %v597 = vld [vmem:[#allocation7 + $0x340] sm:$0xff]
    %v598 = vld [vmem:[#allocation7 + $0x348] sm:$0xff]
    %v599 = vld [vmem:[#allocation7 + $0x350] sm:$0xff]
    %v600 = vld [vmem:[#allocation7 + $0x358] sm:$0xff]
    %v601 = vld [vmem:[#allocation7 + $0x360] sm:$0xff]
    %v602 = vld [vmem:[#allocation7 + $0x368] sm:$0xff]
    %v603 = vld [vmem:[#allocation7 + $0x370] sm:$0xff]
    %v604 = vld [vmem:[#allocation7 + $0x378] sm:$0xff]
    %v605 = vld [vmem:[#allocation7 + $0x380] sm:$0xff]
    %v606 = vld [vmem:[#allocation7 + $0x388] sm:$0xff]
    %v607 = vld [vmem:[#allocation7 + $0x390] sm:$0xff]
    %v608 = vld [vmem:[#allocation7 + $0x398] sm:$0xff]
    %v609 = vld [vmem:[#allocation7 + $0x3a0] sm:$0xff]
    %v610 = vld [vmem:[#allocation7 + $0x3a8] sm:$0xff]
    %v611 = vld [vmem:[#allocation7 + $0x3b0] sm:$0xff]
    %v612 = vld [vmem:[#allocation7 + $0x3b8] sm:$0xff]
    %v613 = vld [vmem:[#allocation7 + $0x3c0] sm:$0xff]
    %v614 = vld [vmem:[#allocation7 + $0x3c8] sm:$0xff]
    %v615 = vld [vmem:[#allocation7 + $0x3d0] sm:$0xff]
    %v616 = vld [vmem:[#allocation7 + $0x3d8] sm:$0xff]
    %v617 = vld [vmem:[#allocation7 + $0x3e0] sm:$0xff]
    %v618 = vld [vmem:[#allocation7 + $0x3e8] sm:$0xff]
    %v619 = vld [vmem:[#allocation7 + $0x3f0] sm:$0xff]
    %v620 = vld [vmem:[#allocation7 + $0x3f8] sm:$0xff]
    %v621 = vld [vmem:[%s5] sm:$0xf]
    %v623 = vlaneseq
    %v624 = vshrl.u32 %v623, 7
    %v625 = vsub.s32 0, %v624
    %v626 = vrot.slane %v621, %v625
    %v627 = vlaneseq
    %v628 = vshrl.u32 %v627, 7
    %v629 = vsub.s32 1, %v628
    %v630 = vrot.slane %v621, %v629
    %v631 = vlaneseq
    %v632 = vshrl.u32 %v631, 7
    %v633 = vsub.s32 2, %v632
    %v634 = vrot.slane %v621, %v633
    %v635 = vlaneseq
    %v636 = vshrl.u32 %v635, 7
    %v637 = vsub.s32 3, %v636
    %v638 = vrot.slane %v621, %v637
    %v771 = vunpack.c.l.b16 %v493
    %v772 = vunpack.c.h.b16 %v493
    %v773 = vunpack.c.l.b16 %v494
    %v774 = vunpack.c.h.b16 %v494
    %v775 = vunpack.c.l.b16 %v495
    %v776 = vunpack.c.h.b16 %v495
    %v777 = vunpack.c.l.b16 %v496
    %v778 = vunpack.c.h.b16 %v496
    %v779 = vunpack.c.l.b16 %v497
    %v780 = vunpack.c.h.b16 %v497
    %v781 = vunpack.c.l.b16 %v498
    %v782 = vunpack.c.h.b16 %v498
    %v783 = vunpack.c.l.b16 %v499
    %v784 = vunpack.c.h.b16 %v499
    %v785 = vunpack.c.l.b16 %v500
    %v786 = vunpack.c.h.b16 %v500
    %v787 = vunpack.c.l.b16 %v501
    %v788 = vunpack.c.h.b16 %v501
    %v789 = vunpack.c.l.b16 %v502
    %v790 = vunpack.c.h.b16 %v502
    %v791 = vunpack.c.l.b16 %v503
    %v792 = vunpack.c.h.b16 %v503
    %v793 = vunpack.c.l.b16 %v504
    %v794 = vunpack.c.h.b16 %v504
    %v795 = vunpack.c.l.b16 %v505
    %v796 = vunpack.c.h.b16 %v505
    %v797 = vunpack.c.l.b16 %v506
    %v798 = vunpack.c.h.b16 %v506
    %v799 = vunpack.c.l.b16 %v507
    %v800 = vunpack.c.h.b16 %v507
    %v801 = vunpack.c.l.b16 %v508
    %v802 = vunpack.c.h.b16 %v508
    %v803 = vunpack.c.l.b16 %v509
    %v804 = vunpack.c.h.b16 %v509
    %v805 = vunpack.c.l.b16 %v510
    %v806 = vunpack.c.h.b16 %v510
    %v807 = vunpack.c.l.b16 %v511
    %v808 = vunpack.c.h.b16 %v511
    %v809 = vunpack.c.l.b16 %v512
    %v810 = vunpack.c.h.b16 %v512
    %v811 = vunpack.c.l.b16 %v513
    %v812 = vunpack.c.h.b16 %v513
    %v813 = vunpack.c.l.b16 %v514
    %v814 = vunpack.c.h.b16 %v514
    %v815 = vunpack.c.l.b16 %v515
    %v816 = vunpack.c.h.b16 %v515
    %v817 = vunpack.c.l.b16 %v516
    %v818 = vunpack.c.h.b16 %v516
    %v819 = vunpack.c.l.b16 %v517
    %v820 = vunpack.c.h.b16 %v517
    %v821 = vunpack.c.l.b16 %v518
    %v822 = vunpack.c.h.b16 %v518
    %v823 = vunpack.c.l.b16 %v519
    %v824 = vunpack.c.h.b16 %v519
    %v825 = vunpack.c.l.b16 %v520
    %v826 = vunpack.c.h.b16 %v520
    %v827 = vunpack.c.l.b16 %v521
    %v828 = vunpack.c.h.b16 %v521
    %v829 = vunpack.c.l.b16 %v522
    %v830 = vunpack.c.h.b16 %v522
    %v831 = vunpack.c.l.b16 %v523
    %v832 = vunpack.c.h.b16 %v523
    %v833 = vunpack.c.l.b16 %v524
    %v834 = vunpack.c.h.b16 %v524
    %v835 = vunpack.c.l.b16 %v525
    %v836 = vunpack.c.h.b16 %v525
    %v837 = vunpack.c.l.b16 %v526
    %v838 = vunpack.c.h.b16 %v526
    %v839 = vunpack.c.l.b16 %v527
    %v840 = vunpack.c.h.b16 %v527
    %v841 = vunpack.c.l.b16 %v528
    %v842 = vunpack.c.h.b16 %v528
    %v843 = vunpack.c.l.b16 %v529
    %v844 = vunpack.c.h.b16 %v529
    %v845 = vunpack.c.l.b16 %v530
    %v846 = vunpack.c.h.b16 %v530
    %v847 = vunpack.c.l.b16 %v531
    %v848 = vunpack.c.h.b16 %v531
    %v849 = vunpack.c.l.b16 %v532
    %v850 = vunpack.c.h.b16 %v532
    %v851 = vunpack.c.l.b16 %v533
    %v852 = vunpack.c.h.b16 %v533
    %v853 = vunpack.c.l.b16 %v534
    %v854 = vunpack.c.h.b16 %v534
    %v855 = vunpack.c.l.b16 %v535
    %v856 = vunpack.c.h.b16 %v535
    %v857 = vunpack.c.l.b16 %v536
    %v858 = vunpack.c.h.b16 %v536
    %v859 = vunpack.c.l.b16 %v537
    %v860 = vunpack.c.h.b16 %v537
    %v861 = vunpack.c.l.b16 %v538
    %v862 = vunpack.c.h.b16 %v538
    %v863 = vunpack.c.l.b16 %v539
    %v864 = vunpack.c.h.b16 %v539
    %v865 = vunpack.c.l.b16 %v540
    %v866 = vunpack.c.h.b16 %v540
    %v867 = vunpack.c.l.b16 %v541
    %v868 = vunpack.c.h.b16 %v541
    %v869 = vunpack.c.l.b16 %v542
    %v870 = vunpack.c.h.b16 %v542
    %v871 = vunpack.c.l.b16 %v543
    %v872 = vunpack.c.h.b16 %v543
    %v873 = vunpack.c.l.b16 %v544
    %v874 = vunpack.c.h.b16 %v544
    %v875 = vunpack.c.l.b16 %v545
    %v876 = vunpack.c.h.b16 %v545
    %v877 = vunpack.c.l.b16 %v546
    %v878 = vunpack.c.h.b16 %v546
    %v879 = vunpack.c.l.b16 %v547
    %v880 = vunpack.c.h.b16 %v547
    %v881 = vunpack.c.l.b16 %v548
    %v882 = vunpack.c.h.b16 %v548
    %v883 = vunpack.c.l.b16 %v549
    %v884 = vunpack.c.h.b16 %v549
    %v885 = vunpack.c.l.b16 %v550
    %v886 = vunpack.c.h.b16 %v550
    %v887 = vunpack.c.l.b16 %v551
    %v888 = vunpack.c.h.b16 %v551
    %v889 = vunpack.c.l.b16 %v552
    %v890 = vunpack.c.h.b16 %v552
    %v891 = vunpack.c.l.b16 %v553
    %v892 = vunpack.c.h.b16 %v553
    %v893 = vunpack.c.l.b16 %v554
    %v894 = vunpack.c.h.b16 %v554
    %v895 = vunpack.c.l.b16 %v555
    %v896 = vunpack.c.h.b16 %v555
    %v897 = vunpack.c.l.b16 %v556
    %v898 = vunpack.c.h.b16 %v556
    %v899 = vunpack.c.l.b16 %v557
    %v900 = vunpack.c.h.b16 %v557
    %v901 = vunpack.c.l.b16 %v558
    %v902 = vunpack.c.h.b16 %v558
    %v903 = vunpack.c.l.b16 %v559
    %v904 = vunpack.c.h.b16 %v559
    %v905 = vunpack.c.l.b16 %v560
    %v906 = vunpack.c.h.b16 %v560
    %v907 = vunpack.c.l.b16 %v561
    %v908 = vunpack.c.h.b16 %v561
    %v909 = vunpack.c.l.b16 %v562
    %v910 = vunpack.c.h.b16 %v562
    %v911 = vunpack.c.l.b16 %v563
    %v912 = vunpack.c.h.b16 %v563
    %v913 = vunpack.c.l.b16 %v564
    %v914 = vunpack.c.h.b16 %v564
    %v915 = vunpack.c.l.b16 %v565
    %v916 = vunpack.c.h.b16 %v565
    %v917 = vunpack.c.l.b16 %v566
    %v918 = vunpack.c.h.b16 %v566
    %v919 = vunpack.c.l.b16 %v567
    %v920 = vunpack.c.h.b16 %v567
    %v921 = vunpack.c.l.b16 %v568
    %v922 = vunpack.c.h.b16 %v568
    %v923 = vunpack.c.l.b16 %v569
    %v924 = vunpack.c.h.b16 %v569
    %v925 = vunpack.c.l.b16 %v570
    %v926 = vunpack.c.h.b16 %v570
    %v927 = vunpack.c.l.b16 %v571
    %v928 = vunpack.c.h.b16 %v571
    %v929 = vunpack.c.l.b16 %v572
    %v930 = vunpack.c.h.b16 %v572
    %v931 = vunpack.c.l.b16 %v573
    %v932 = vunpack.c.h.b16 %v573
    %v933 = vunpack.c.l.b16 %v574
    %v934 = vunpack.c.h.b16 %v574
    %v935 = vunpack.c.l.b16 %v575
    %v936 = vunpack.c.h.b16 %v575
    %v937 = vunpack.c.l.b16 %v576
    %v938 = vunpack.c.h.b16 %v576
    %v939 = vunpack.c.l.b16 %v577
    %v940 = vunpack.c.h.b16 %v577
    %v941 = vunpack.c.l.b16 %v578
    %v942 = vunpack.c.h.b16 %v578
    %v943 = vunpack.c.l.b16 %v579
    %v944 = vunpack.c.h.b16 %v579
    %v945 = vunpack.c.l.b16 %v580
    %v946 = vunpack.c.h.b16 %v580
    %v947 = vunpack.c.l.b16 %v581
    %v948 = vunpack.c.h.b16 %v581
    %v949 = vunpack.c.l.b16 %v582
    %v950 = vunpack.c.h.b16 %v582
    %v951 = vunpack.c.l.b16 %v583
    %v952 = vunpack.c.h.b16 %v583
    %v953 = vunpack.c.l.b16 %v584
    %v954 = vunpack.c.h.b16 %v584
    %v955 = vunpack.c.l.b16 %v585
    %v956 = vunpack.c.h.b16 %v585
    %v957 = vunpack.c.l.b16 %v586
    %v958 = vunpack.c.h.b16 %v586
    %v959 = vunpack.c.l.b16 %v587
    %v960 = vunpack.c.h.b16 %v587
    %v961 = vunpack.c.l.b16 %v588
    %v962 = vunpack.c.h.b16 %v588
    %v963 = vunpack.c.l.b16 %v589
    %v964 = vunpack.c.h.b16 %v589
    %v965 = vunpack.c.l.b16 %v590
    %v966 = vunpack.c.h.b16 %v590
    %v967 = vunpack.c.l.b16 %v591
    %v968 = vunpack.c.h.b16 %v591
    %v969 = vunpack.c.l.b16 %v592
    %v970 = vunpack.c.h.b16 %v592
    %v971 = vunpack.c.l.b16 %v593
    %v972 = vunpack.c.h.b16 %v593
    %v973 = vunpack.c.l.b16 %v594
    %v974 = vunpack.c.h.b16 %v594
    %v975 = vunpack.c.l.b16 %v595
    %v976 = vunpack.c.h.b16 %v595
    %v977 = vunpack.c.l.b16 %v596
    %v978 = vunpack.c.h.b16 %v596
    %v979 = vunpack.c.l.b16 %v597
    %v980 = vunpack.c.h.b16 %v597
    %v981 = vunpack.c.l.b16 %v598
    %v982 = vunpack.c.h.b16 %v598
    %v983 = vunpack.c.l.b16 %v599
    %v984 = vunpack.c.h.b16 %v599
    %v985 = vunpack.c.l.b16 %v600
    %v986 = vunpack.c.h.b16 %v600
    %v987 = vunpack.c.l.b16 %v601
    %v988 = vunpack.c.h.b16 %v601
    %v989 = vunpack.c.l.b16 %v602
    %v990 = vunpack.c.h.b16 %v602
    %v991 = vunpack.c.l.b16 %v603
    %v992 = vunpack.c.h.b16 %v603
    %v993 = vunpack.c.l.b16 %v604
    %v994 = vunpack.c.h.b16 %v604
    %v995 = vunpack.c.l.b16 %v605
    %v996 = vunpack.c.h.b16 %v605
    %v997 = vunpack.c.l.b16 %v606
    %v998 = vunpack.c.h.b16 %v606
    %v999 = vunpack.c.l.b16 %v607
    %v1000 = vunpack.c.h.b16 %v607
    %v1001 = vunpack.c.l.b16 %v608
    %v1002 = vunpack.c.h.b16 %v608
    %v1003 = vunpack.c.l.b16 %v609
    %v1004 = vunpack.c.h.b16 %v609
    %v1005 = vunpack.c.l.b16 %v610
    %v1006 = vunpack.c.h.b16 %v610
    %v1007 = vunpack.c.l.b16 %v611
    %v1008 = vunpack.c.h.b16 %v611
    %v1009 = vunpack.c.l.b16 %v612
    %v1010 = vunpack.c.h.b16 %v612
    %v1011 = vunpack.c.l.b16 %v613
    %v1012 = vunpack.c.h.b16 %v613
    %v1013 = vunpack.c.l.b16 %v614
    %v1014 = vunpack.c.h.b16 %v614
    %v1015 = vunpack.c.l.b16 %v615
    %v1016 = vunpack.c.h.b16 %v615
    %v1017 = vunpack.c.l.b16 %v616
    %v1018 = vunpack.c.h.b16 %v616
    %v1019 = vunpack.c.l.b16 %v617
    %v1020 = vunpack.c.h.b16 %v617
    %v1021 = vunpack.c.l.b16 %v618
    %v1022 = vunpack.c.h.b16 %v618
    %v1023 = vunpack.c.l.b16 %v619
    %v1024 = vunpack.c.h.b16 %v619
    %v1025 = vunpack.c.l.b16 %v620
    %v1026 = vunpack.c.h.b16 %v620
    %v1027 = vpack.c.b16 %v775, %v771
    %v1028 = vpack.c.b16 %v776, %v772
    %v1029 = vpack.c.b16 %v777, %v773
    %v1030 = vpack.c.b16 %v778, %v774
    %v1031 = vpack.c.b16 %v783, %v779
    %v1032 = vpack.c.b16 %v784, %v780
    %v1033 = vpack.c.b16 %v785, %v781
    %v1034 = vpack.c.b16 %v786, %v782
    %v1035 = vpack.c.b16 %v791, %v787
    %v1036 = vpack.c.b16 %v792, %v788
    %v1037 = vpack.c.b16 %v793, %v789
    %v1038 = vpack.c.b16 %v794, %v790
    %v1039 = vpack.c.b16 %v799, %v795
    %v1040 = vpack.c.b16 %v800, %v796
    %v1041 = vpack.c.b16 %v801, %v797
    %v1042 = vpack.c.b16 %v802, %v798
    %v1043 = vpack.c.b16 %v807, %v803
    %v1044 = vpack.c.b16 %v808, %v804
    %v1045 = vpack.c.b16 %v809, %v805
    %v1046 = vpack.c.b16 %v810, %v806
    %v1047 = vpack.c.b16 %v815, %v811
    %v1048 = vpack.c.b16 %v816, %v812
    %v1049 = vpack.c.b16 %v817, %v813
    %v1050 = vpack.c.b16 %v818, %v814
    %v1051 = vpack.c.b16 %v823, %v819
    %v1052 = vpack.c.b16 %v824, %v820
    %v1053 = vpack.c.b16 %v825, %v821
    %v1054 = vpack.c.b16 %v826, %v822
    %v1055 = vpack.c.b16 %v831, %v827
    %v1056 = vpack.c.b16 %v832, %v828
    %v1057 = vpack.c.b16 %v833, %v829
    %v1058 = vpack.c.b16 %v834, %v830
    %v1059 = vpack.c.b16 %v839, %v835
    %v1060 = vpack.c.b16 %v840, %v836
    %v1061 = vpack.c.b16 %v841, %v837
    %v1062 = vpack.c.b16 %v842, %v838
    %v1063 = vpack.c.b16 %v847, %v843
    %v1064 = vpack.c.b16 %v848, %v844
    %v1065 = vpack.c.b16 %v849, %v845
    %v1066 = vpack.c.b16 %v850, %v846
    %v1067 = vpack.c.b16 %v855, %v851
    %v1068 = vpack.c.b16 %v856, %v852
    %v1069 = vpack.c.b16 %v857, %v853
    %v1070 = vpack.c.b16 %v858, %v854
    %v1071 = vpack.c.b16 %v863, %v859
    %v1072 = vpack.c.b16 %v864, %v860
    %v1073 = vpack.c.b16 %v865, %v861
    %v1074 = vpack.c.b16 %v866, %v862
    %v1075 = vpack.c.b16 %v871, %v867
    %v1076 = vpack.c.b16 %v872, %v868
    %v1077 = vpack.c.b16 %v873, %v869
    %v1078 = vpack.c.b16 %v874, %v870
    %v1079 = vpack.c.b16 %v879, %v875
    %v1080 = vpack.c.b16 %v880, %v876
    %v1081 = vpack.c.b16 %v881, %v877
    %v1082 = vpack.c.b16 %v882, %v878
    %v1083 = vpack.c.b16 %v887, %v883
    %v1084 = vpack.c.b16 %v888, %v884
    %v1085 = vpack.c.b16 %v889, %v885
    %v1086 = vpack.c.b16 %v890, %v886
    %v1087 = vpack.c.b16 %v895, %v891
    %v1088 = vpack.c.b16 %v896, %v892
    %v1089 = vpack.c.b16 %v897, %v893
    %v1090 = vpack.c.b16 %v898, %v894
    %v1091 = vpack.c.b16 %v903, %v899
    %v1092 = vpack.c.b16 %v904, %v900
    %v1093 = vpack.c.b16 %v905, %v901
    %v1094 = vpack.c.b16 %v906, %v902
    %v1095 = vpack.c.b16 %v911, %v907
    %v1096 = vpack.c.b16 %v912, %v908
    %v1097 = vpack.c.b16 %v913, %v909
    %v1098 = vpack.c.b16 %v914, %v910
    %v1099 = vpack.c.b16 %v919, %v915
    %v1100 = vpack.c.b16 %v920, %v916
    %v1101 = vpack.c.b16 %v921, %v917
    %v1102 = vpack.c.b16 %v922, %v918
    %v1103 = vpack.c.b16 %v927, %v923
    %v1104 = vpack.c.b16 %v928, %v924
    %v1105 = vpack.c.b16 %v929, %v925
    %v1106 = vpack.c.b16 %v930, %v926
    %v1107 = vpack.c.b16 %v935, %v931
    %v1108 = vpack.c.b16 %v936, %v932
    %v1109 = vpack.c.b16 %v937, %v933
    %v1110 = vpack.c.b16 %v938, %v934
    %v1111 = vpack.c.b16 %v943, %v939
    %v1112 = vpack.c.b16 %v944, %v940
    %v1113 = vpack.c.b16 %v945, %v941
    %v1114 = vpack.c.b16 %v946, %v942
    %v1115 = vpack.c.b16 %v951, %v947
    %v1116 = vpack.c.b16 %v952, %v948
    %v1117 = vpack.c.b16 %v953, %v949
    %v1118 = vpack.c.b16 %v954, %v950
    %v1119 = vpack.c.b16 %v959, %v955
    %v1120 = vpack.c.b16 %v960, %v956
    %v1121 = vpack.c.b16 %v961, %v957
    %v1122 = vpack.c.b16 %v962, %v958
    %v1123 = vpack.c.b16 %v967, %v963
    %v1124 = vpack.c.b16 %v968, %v964
    %v1125 = vpack.c.b16 %v969, %v965
    %v1126 = vpack.c.b16 %v970, %v966
    %v1127 = vpack.c.b16 %v975, %v971
    %v1128 = vpack.c.b16 %v976, %v972
    %v1129 = vpack.c.b16 %v977, %v973
    %v1130 = vpack.c.b16 %v978, %v974
    %v1131 = vpack.c.b16 %v983, %v979
    %v1132 = vpack.c.b16 %v984, %v980
    %v1133 = vpack.c.b16 %v985, %v981
    %v1134 = vpack.c.b16 %v986, %v982
    %v1135 = vpack.c.b16 %v991, %v987
    %v1136 = vpack.c.b16 %v992, %v988
    %v1137 = vpack.c.b16 %v993, %v989
    %v1138 = vpack.c.b16 %v994, %v990
    %v1139 = vpack.c.b16 %v999, %v995
    %v1140 = vpack.c.b16 %v1000, %v996
    %v1141 = vpack.c.b16 %v1001, %v997
    %v1142 = vpack.c.b16 %v1002, %v998
    %v1143 = vpack.c.b16 %v1007, %v1003
    %v1144 = vpack.c.b16 %v1008, %v1004
    %v1145 = vpack.c.b16 %v1009, %v1005
    %v1146 = vpack.c.b16 %v1010, %v1006
    %v1147 = vpack.c.b16 %v1015, %v1011
    %v1148 = vpack.c.b16 %v1016, %v1012
    %v1149 = vpack.c.b16 %v1017, %v1013
    %v1150 = vpack.c.b16 %v1018, %v1014
    %v1151 = vpack.c.b16 %v1023, %v1019
    %v1152 = vpack.c.b16 %v1024, %v1020
    %v1153 = vpack.c.b16 %v1025, %v1021
    %v1154 = vpack.c.b16 %v1026, %v1022
    %1283 = vmatprep.subr.bf16.mxu0 %v1056
    %1284 = vmatpush1.bf16.msra.mxu0 %v1055
    %1285 = vmatprep.subr.bf16.mxu0 %v1052
    %1286 = vmatpush1.bf16.msra.mxu0 %v1051
    %1287 = vmatprep.subr.bf16.mxu0 %v1048
    %1288 = vmatpush1.bf16.msra.mxu0 %v1047
    %1289 = vmatprep.subr.bf16.mxu0 %v1044
    %1290 = vmatpush1.bf16.msra.mxu0 %v1043
    %1291 = vmatprep.subr.bf16.mxu0 %v1040
    %1292 = vmatpush1.bf16.msra.mxu0 %v1039
    %1293 = vmatprep.subr.bf16.mxu0 %v1036
    %1294 = vmatpush1.bf16.msra.mxu0 %v1035
    %1295 = vmatprep.subr.bf16.mxu0 %v1032
    %1296 = vmatpush1.bf16.msra.mxu0 %v1031
    %1297 = vmatprep.subr.bf16.mxu0 %v1028
    %1298 = vmatpush1.bf16.msra.mxu0 %v1027
    %1299 = vmatprep.subr.bf16.mxu0 %v1088
    %1300 = vmatpush2.bf16.msra.mxu0 %v1087
    %1301 = vmatprep.subr.bf16.mxu0 %v1084
    %1302 = vmatpush2.bf16.msra.mxu0 %v1083
    %1303 = vmatprep.subr.bf16.mxu0 %v1080
    %1304 = vmatpush2.bf16.msra.mxu0 %v1079
    %1305 = vmatprep.subr.bf16.mxu0 %v1076
    %1306 = vmatpush2.bf16.msra.mxu0 %v1075
    %1307 = vmatprep.subr.bf16.mxu0 %v1072
    %1308 = vmatpush2.bf16.msra.mxu0 %v1071
    %1309 = vmatprep.subr.bf16.mxu0 %v1068
    %1310 = vmatpush2.bf16.msra.mxu0 %v1067
    %1311 = vmatprep.subr.bf16.mxu0 %v1064
    %1312 = vmatpush2.bf16.msra.mxu0 %v1063
    %1313 = vmatprep.subr.bf16.mxu0 %v1060
    %1314 = vmatpush2.bf16.msra.mxu0 %v1059
    %1315 = vmatprep.mubr.bf16.mxu0 %v490
    %1316 = vmatmul.mubr.bf16.gmra.mxu0 %v489
    %v1317 = vpop.f32.mrf.mxu0
    %v1318 = vadd.f32 %v626, %v1317
    %v1319 = vpop.f32.mrf.mxu0
    %v1320 = vadd.f32 %v630, %v1319
    %v1321 = vpop.f32.mrf.mxu0
    %v1322 = vpop.f32.mrf.mxu0
    %1323 = vdwg.mxu0
    %1324 = vmatprep.subr.bf16.mxu0 %v1120
    %1325 = vmatpush1.bf16.msra.mxu0 %v1119
    %1326 = vmatprep.subr.bf16.mxu0 %v1116
    %1327 = vmatpush1.bf16.msra.mxu0 %v1115
    %1328 = vmatprep.subr.bf16.mxu0 %v1112
    %1329 = vmatpush1.bf16.msra.mxu0 %v1111
    %1330 = vmatprep.subr.bf16.mxu0 %v1108
    %1331 = vmatpush1.bf16.msra.mxu0 %v1107
    %1332 = vmatprep.subr.bf16.mxu0 %v1104
    %1333 = vmatpush1.bf16.msra.mxu0 %v1103
    %1334 = vmatprep.subr.bf16.mxu0 %v1100
    %1335 = vmatpush1.bf16.msra.mxu0 %v1099
    %1336 = vmatprep.subr.bf16.mxu0 %v1096
    %1337 = vmatpush1.bf16.msra.mxu0 %v1095
    %1338 = vmatprep.subr.bf16.mxu0 %v1092
    %1339 = vmatpush1.bf16.msra.mxu0 %v1091
    %1340 = vmatprep.subr.bf16.mxu0 %v1152
    %1341 = vmatpush2.bf16.msra.mxu0 %v1151
    %1342 = vmatprep.subr.bf16.mxu0 %v1148
    %1343 = vmatpush2.bf16.msra.mxu0 %v1147
    %1344 = vmatprep.subr.bf16.mxu0 %v1144
    %1345 = vmatpush2.bf16.msra.mxu0 %v1143
    %1346 = vmatprep.subr.bf16.mxu0 %v1140
    %1347 = vmatpush2.bf16.msra.mxu0 %v1139
    %1348 = vmatprep.subr.bf16.mxu0 %v1136
    %1349 = vmatpush2.bf16.msra.mxu0 %v1135
    %1350 = vmatprep.subr.bf16.mxu0 %v1132
    %1351 = vmatpush2.bf16.msra.mxu0 %v1131
    %1352 = vmatprep.subr.bf16.mxu0 %v1128
    %1353 = vmatpush2.bf16.msra.mxu0 %v1127
    %1354 = vmatprep.subr.bf16.mxu0 %v1124
    %1355 = vmatpush2.bf16.msra.mxu0 %v1123
    %1356 = vmatprep.mubr.bf16.mxu0 %v492
    %1357 = vmatmul.mubr.bf16.gmra.mxu0 %v491
    %v1358 = vpop.f32.mrf.mxu0
    %v1359 = vadd.f32 %v1318, %v1358
    %v1360 = vpop.f32.mrf.mxu0
    %v1361 = vadd.f32 %v1320, %v1360
    %v1362 = vpop.f32.mrf.mxu0
    %v1363 = vpop.f32.mrf.mxu0
    %1364 = vdwg.mxu0
    %1365 = vmatprep.subr.bf16.mxu0 %v1058
    %1366 = vmatpush1.bf16.msra.mxu0 %v1057
    %1367 = vmatprep.subr.bf16.mxu0 %v1054
    %1368 = vmatpush1.bf16.msra.mxu0 %v1053
    %1369 = vmatprep.subr.bf16.mxu0 %v1050
    %1370 = vmatpush1.bf16.msra.mxu0 %v1049
    %1371 = vmatprep.subr.bf16.mxu0 %v1046
    %1372 = vmatpush1.bf16.msra.mxu0 %v1045
    %1373 = vmatprep.subr.bf16.mxu0 %v1042
    %1374 = vmatpush1.bf16.msra.mxu0 %v1041
    %1375 = vmatprep.subr.bf16.mxu0 %v1038
    %1376 = vmatpush1.bf16.msra.mxu0 %v1037
    %1377 = vmatprep.subr.bf16.mxu0 %v1034
    %1378 = vmatpush1.bf16.msra.mxu0 %v1033
    %1379 = vmatprep.subr.bf16.mxu0 %v1030
    %1380 = vmatpush1.bf16.msra.mxu0 %v1029
    %1381 = vmatprep.subr.bf16.mxu0 %v1090
    %1382 = vmatpush2.bf16.msra.mxu0 %v1089
    %1383 = vmatprep.subr.bf16.mxu0 %v1086
    %1384 = vmatpush2.bf16.msra.mxu0 %v1085
    %1385 = vmatprep.subr.bf16.mxu0 %v1082
    %1386 = vmatpush2.bf16.msra.mxu0 %v1081
    %1387 = vmatprep.subr.bf16.mxu0 %v1078
    %1388 = vmatpush2.bf16.msra.mxu0 %v1077
    %1389 = vmatprep.subr.bf16.mxu0 %v1074
    %1390 = vmatpush2.bf16.msra.mxu0 %v1073
    %1391 = vmatprep.subr.bf16.mxu0 %v1070
    %1392 = vmatpush2.bf16.msra.mxu0 %v1069
    %1393 = vmatprep.subr.bf16.mxu0 %v1066
    %1394 = vmatpush2.bf16.msra.mxu0 %v1065
    %1395 = vmatprep.subr.bf16.mxu0 %v1062
    %1396 = vmatpush2.bf16.msra.mxu0 %v1061
    %1397 = vmatprep.mubr.bf16.mxu0 %v490
    %1398 = vmatmul.mubr.bf16.gmra.mxu0 %v489
    %v1399 = vpop.f32.mrf.mxu0
    %v1400 = vadd.f32 %v634, %v1399
    %v1401 = vpop.f32.mrf.mxu0
    %v1402 = vadd.f32 %v638, %v1401
    %v1403 = vpop.f32.mrf.mxu0
    %v1404 = vpop.f32.mrf.mxu0
    %1405 = vdwg.mxu0
    %1406 = vmatprep.subr.bf16.mxu0 %v1122
    %1407 = vmatpush1.bf16.msra.mxu0 %v1121
    %1408 = vmatprep.subr.bf16.mxu0 %v1118
    %1409 = vmatpush1.bf16.msra.mxu0 %v1117
    %1410 = vmatprep.subr.bf16.mxu0 %v1114
    %1411 = vmatpush1.bf16.msra.mxu0 %v1113
    %1412 = vmatprep.subr.bf16.mxu0 %v1110
    %1413 = vmatpush1.bf16.msra.mxu0 %v1109
    %1414 = vmatprep.subr.bf16.mxu0 %v1106
    %1415 = vmatpush1.bf16.msra.mxu0 %v1105
    %1416 = vmatprep.subr.bf16.mxu0 %v1102
    %1417 = vmatpush1.bf16.msra.mxu0 %v1101
    %1418 = vmatprep.subr.bf16.mxu0 %v1098
    %1419 = vmatpush1.bf16.msra.mxu0 %v1097
    %1420 = vmatprep.subr.bf16.mxu0 %v1094
    %1421 = vmatpush1.bf16.msra.mxu0 %v1093
    %1422 = vmatprep.subr.bf16.mxu0 %v1154
    %1423 = vmatpush2.bf16.msra.mxu0 %v1153
    %1424 = vmatprep.subr.bf16.mxu0 %v1150
    %1425 = vmatpush2.bf16.msra.mxu0 %v1149
    %1426 = vmatprep.subr.bf16.mxu0 %v1146
    %1427 = vmatpush2.bf16.msra.mxu0 %v1145
    %1428 = vmatprep.subr.bf16.mxu0 %v1142
    %1429 = vmatpush2.bf16.msra.mxu0 %v1141
    %1430 = vmatprep.subr.bf16.mxu0 %v1138
    %1431 = vmatpush2.bf16.msra.mxu0 %v1137
    %1432 = vmatprep.subr.bf16.mxu0 %v1134
    %1433 = vmatpush2.bf16.msra.mxu0 %v1133
    %1434 = vmatprep.subr.bf16.mxu0 %v1130
    %1435 = vmatpush2.bf16.msra.mxu0 %v1129
    %1436 = vmatprep.subr.bf16.mxu0 %v1126
    %1437 = vmatpush2.bf16.msra.mxu0 %v1125
    %1438 = vmatprep.mubr.bf16.mxu0 %v492
    %1439 = vmatmul.mubr.bf16.gmra.mxu0 %v491
    %v1440 = vpop.f32.mrf.mxu0
    %v1441 = vadd.f32 %v1400, %v1440
    %v1442 = vpop.f32.mrf.mxu0
    %v1443 = vadd.f32 %v1402, %v1442
    %v1444 = vpop.f32.mrf.mxu0
    %v1445 = vpop.f32.mrf.mxu0
    %1446 = vdwg.mxu0
    %v1447 = vxor.u32 %v1359, 2147483648
    %v1448 = vxor.u32 %v1361, 2147483648
    %v1449 = vxor.u32 %v1441, 2147483648
    %v1450 = vxor.u32 %v1443, 2147483648
    %v1451 = vmul.f32 %v1447, 1.442695
    %v1452 = vpow.pop %v1451
    %v1453 = vmul.f32 %v1448, 1.442695
    %v1454 = vpow.pop %v1453
    %v1455 = vmul.f32 %v1449, 1.442695
    %v1456 = vpow.pop %v1455
    %v1457 = vmul.f32 %v1450, 1.442695
    %v1458 = vpow.pop %v1457
    %v1459 = vadd.f32 %v1452, 1.0
    %v1460 = vadd.f32 %v1454, 1.0
    %v1461 = vadd.f32 %v1456, 1.0
    %v1462 = vadd.f32 %v1458, 1.0
    %v1463 = vrcp.pop %v1459
    %v1464 = vmul.f32 1.0, %v1463
    %v1465 = vrcp.pop %v1460
    %v1466 = vmul.f32 1.0, %v1465
    %v1467 = vrcp.pop %v1461
    %v1468 = vmul.f32 1.0, %v1467
    %v1469 = vrcp.pop %v1462
    %v1470 = vmul.f32 1.0, %v1469
    %v1471 = vmul.f32 %v1359, %v1464
    %v1472 = vmul.f32 %v1361, %v1466
    %v1473 = vmul.f32 %v1441, %v1468
    %v1474 = vmul.f32 %v1443, %v1470
    %1475 = vst [vmem:[#allocation8] sm:$0xff] %v1471
    %1476 = vst [vmem:[#allocation8 + $0x8] sm:$0xff] %v1472
    %1477 = vst [vmem:[#allocation8 + $0x10] sm:$0xff] %v1473
    %1478 = vst [vmem:[#allocation8 + $0x18] sm:$0xff] %v1474
    // Predicated region
    $region38: #{tpu_custom_call.1} parent=1 // pred_check
      _
    $region39: #{tpu_custom_call.1} parent=1 // pred_check_branch
      %1480 = sbr.rel (0) target = $region41
    $region40: #{tpu_custom_call.1} parent=1 // pred_region
      %s1482 = ssub.s32 512, 512
      %1483 = vsyncadd [#allocation4], %s1482
      %s1485 = sshll.u32 [#allocation8], 4
      %s1486 = int_to_ptr.vmem [resolvable:$true] %s1485
      %1488 = dma.vmem_to_hbm [thread:$0]  %s1486, 512, %s6, [#allocation4]
    $region41: #{tpu_custom_call.1} parent=1 // pred_fallthru
      _
    // Predicated region
    $region42: #{tpu_custom_call.1} parent=1 // pred_check
      _
    $region43: #{tpu_custom_call.1} parent=1 // pred_check_branch
      %1490 = sbr.rel (0) target = $region45
    $region44: #{tpu_custom_call.1} parent=1 // pred_region
      %1491 = dma.done [#allocation4], 512
    $region45: #{tpu_custom_call.1} parent=1 // pred_fallthru
      _
    %1492 = vsyncpa [#allocation3], 1
    %1493 = vsyncpa [#allocation6], 1
    %1494 = vsyncpa [#allocation4], 1

</llo_original>
